<compile_context>
chip_gen: v6e
topology: v6e:2x2x1
jax: 0.10.0
libtpu: 0.0.40
codegen_flags: <defaults>
</compile_context>

<pallas_src>
import jax
import jax.numpy as jnp
from jax.experimental import pallas as pl
from jax.experimental.pallas import tpu as pltpu

EPS = 1e-6


def _output_layer_kernel(x_ref, w_ref, bias_ref, o_ref):
    """Fused LayerNorm (eps=1e-6, affine pre-folded into w/bias) + Linear."""
    x = x_ref[...].astype(jnp.float32)

    # LayerNorm statistics in f32 (biased variance, matching nn.LayerNorm).
    mean = jnp.mean(x, axis=-1, keepdims=True)
    centered = x - mean
    var = jnp.mean(centered * centered, axis=-1, keepdims=True)
    xn = centered * jax.lax.rsqrt(var + EPS)

    # LHS stays f32 (kernel is HBM-bound; the extra MXU passes hide under DMA).
    # Weight lives in bf16 (half the HBM/VMEM footprint) and is widened here.
    y = jnp.dot(xn, w_ref[...].astype(jnp.float32),
                preferred_element_type=jnp.float32)
    y = y + bias_ref[...]                    # folded bias kept in f32
    o_ref[...] = y.astype(o_ref.dtype)


def prepare_output_layer_params(gamma, beta, w, bias, *,
                                weight_dtype=jnp.bfloat16):
    """One-time parameter prep (hoisted out of the per-call hot path).

    Folds the LayerNorm affine into the projection (exact algebra in f32):
        w' = diag(gamma) @ w,   b' = beta @ w + bias
    Returns (w_fold[H, D_out] in `weight_dtype`, bias_fold[1, D_out] in f32).
    """
    w_f32 = w.astype(jnp.float32)
    w_fold = gamma.astype(jnp.float32)[:, None] * w_f32
    bias_fold = beta.astype(jnp.float32) @ w_f32 + bias.astype(jnp.float32)
    return w_fold.astype(weight_dtype), bias_fold.reshape(1, -1)


def _round_up(x, m):
    return (x + m - 1) // m * m


def _pick_row_tile(rows, block_rows):
    """Largest sublane-aligned (multiple-of-8) divisor of `rows` that is
    <= block_rows, preferring a grid of >= 2 steps (v7x has 2 TensorCores).
    Returns None if `rows` has no friendly divisor."""
    if rows % 8 != 0:
        return None
    cap = min(block_rows, rows)
    if rows >= 16:
        cap = min(cap, rows // 2)            # keep >= 2 grid steps when possible
    cap = (cap // 8) * 8
    for tm in range(cap, 7, -8):
        if rows % tm == 0:
            return tm
    return None


def _vmem_limit(bytes_needed):
    """Generation-aware VMEM cap: physical capacity minus compiler headroom."""
    try:
        cap = pltpu.get_tpu_info().vmem_capacity_bytes
    except Exception:
        cap = 64 << 20                       # conservative (v7x physical)
    ceiling = max(cap - (16 << 20), 16 << 20)  # ~48 MiB v7x, ~112 MiB v5e/v6e
    return int(min(max(2 * bytes_needed, 32 << 20), ceiling))


def output_layer(x, w_fold, bias_fold, *, block_rows=1024):
    """x: (B, S, H); w_fold: (H, D_out) folded weight; bias_fold: (1, D_out)."""
    B, S, H = x.shape
    D_out = w_fold.shape[1]
    rows = B * S
    x2 = x.reshape(rows, H)

    # ---- Row tiling: prefer divisor tiles (no padded HBM copy of x).
    tm = _pick_row_tile(rows, block_rows)
    if tm is not None and not (tm < 64 and rows > 4 * tm):
        rows_p = rows
    else:
        # Ragged fallback: pad rows (one extra HBM pass; LN-safe, sliced off).
        rows_aligned = _round_up(rows, 8)
        tm = min(block_rows, rows_aligned)
        if rows_aligned >= 16 and tm > rows_aligned // 2:
            tm = max(8, ((rows_aligned // 2) // 8) * 8)   # keep >= 2 grid steps
        rows_p = _round_up(rows, tm)
        x2 = jnp.pad(x2, ((0, rows_p - rows), (0, 0)))

    grid = (rows_p // tm,)

    # ---- VMEM budget: double-buffered x/out tiles + single resident weight.
    out_bytes = jnp.dtype(x.dtype).itemsize
    w_bytes = jnp.dtype(w_fold.dtype).itemsize
    vmem_need = (2 * (tm * H * 4 + tm * D_out * out_bytes)
                 + H * D_out * w_bytes + D_out * 4)
    vmem_limit = _vmem_limit(vmem_need)

    def _call(single_buffer_consts):
        const_kw = ({"pipeline_mode": pl.Buffered(1)}
                    if single_buffer_consts else {})
        return pl.pallas_call(
            _output_layer_kernel,
            out_shape=jax.ShapeDtypeStruct((rows_p, D_out), x.dtype),
            grid_spec=pltpu.PrefetchScalarGridSpec(
                num_scalar_prefetch=0,
                grid=grid,
                in_specs=[
                    pl.BlockSpec((tm, H), lambda i: (i, 0)),       # token rows
                    pl.BlockSpec((H, D_out), lambda i: (0, 0),     # folded W
                                 **const_kw),
                    pl.BlockSpec((1, D_out), lambda i: (0, 0),     # folded bias
                                 **const_kw),
                ],
                out_specs=pl.BlockSpec((tm, D_out), lambda i: (i, 0)),
            ),
            compiler_params=pltpu.CompilerParams(
                dimension_semantics=("parallel",),
                vmem_limit_bytes=vmem_limit,
            ),
        )(x2, w_fold, bias_fold)

    try:
        out = _call(True)        # single-buffered constant weight/bias
    except Exception:
        out = _call(False)       # fallback if pipeline_mode isn't supported

    if rows_p != rows:
        out = out[:rows]
    return out.reshape(B, S, D_out)


def reference(x, gamma, beta, w, bias):
    xf = x.astype(jnp.float32)
    mean = jnp.mean(xf, axis=-1, keepdims=True)
    var = jnp.mean((xf - mean) ** 2, axis=-1, keepdims=True)
    xn = (xf - mean) / jnp.sqrt(var + EPS)
    xn = xn * gamma + beta
    return (xn @ w + bias).astype(x.dtype)


if __name__ == "__main__":
    # Small shapes consistent with the module:
    #   hidden_size=32, temporal_patch_size=2, patch_size=4, out_channels=3
    #   => D_out = 2*4*4*3 = 96
    B, S, H = 2, 8, 32
    temporal_patch_size, patch_size, out_channels = 2, 4, 3
    D_out = temporal_patch_size * patch_size * patch_size * out_channels

    key = jax.random.PRNGKey(0)
    kx, kg, kb, kw, kbias = jax.random.split(key, 5)

    x = jax.random.normal(kx, (B, S, H), dtype=jnp.float32)
    # Deterministic synthetic parameters (not a checkpoint load).
    gamma = 1.0 + 0.02 * jax.random.normal(kg, (H,), dtype=jnp.float32)
    beta = 0.02 * jax.random.normal(kb, (H,), dtype=jnp.float32)
    w = jax.random.normal(kw, (H, D_out), dtype=jnp.float32) / jnp.sqrt(H)
    bias = 0.02 * jax.random.normal(kbias, (D_out,), dtype=jnp.float32)

    # One-time parameter prep (fold + bf16 cast), hoisted out of the hot path.
    w_fold, bias_fold = prepare_output_layer_params(gamma, beta, w, bias)
    w_fold, bias_fold = jax.block_until_ready((w_fold, bias_fold))

    out = output_layer(x, w_fold, bias_fold)
    out = jax.block_until_ready(out)

    ref = reference(x, gamma, beta, w, bias)
    assert out.shape == (B, S, D_out)
    # bf16 folded weight => small deviation from the all-f32 reference.
    assert jnp.allclose(out, ref, atol=5e-2, rtol=5e-2), "mismatch vs reference"

    print("KERNEL_OK")
</pallas_src>

<mosaic_0001>
module attributes {stable_mosaic.version = 11 : i64} {
  func.func @_output_layer_kernel(%arg0: i32, %arg1: memref<8x32xf32, #tpu.memory_space<vmem>>, %arg2: memref<32x96xbf16, #tpu.memory_space<vmem>>, %arg3: memref<1x96xf32, #tpu.memory_space<vmem>>, %arg4: memref<8x96xf32, #tpu.memory_space<vmem>>) attributes {dimension_semantics = [#tpu.dimension_semantics<parallel>], iteration_bounds = array<i64: 2>, scalar_prefetch = 0 : i64, scratch_operands = 0 : i64, tpu.core_type = #tpu.core_type<tc>, window_params = [{transform_indices = @transform_0, window_bounds = array<i64: 8, 32>}, {pipeline_mode = #tpu.pipeline_mode<synchronous>, transform_indices = @transform_1, window_bounds = array<i64: 32, 96>}, {pipeline_mode = #tpu.pipeline_mode<synchronous>, transform_indices = @transform_2, window_bounds = array<i64: 1, 96>}, {transform_indices = @transform_3, window_bounds = array<i64: 8, 96>}]} {
    %c0 = arith.constant 0 : index
    %c0_0 = arith.constant 0 : index
    %0 = vector.load %arg1[%c0, %c0_0] : memref<8x32xf32, #tpu.memory_space<vmem>>, vector<8x32xf32>
    %cst = arith.constant dense<0.000000e+00> : vector<8xf32>
    %1 = vector.multi_reduction <add>, %0, %cst [1] : vector<8x32xf32> to vector<8xf32>
    %2 = vector.shape_cast %1 : vector<8xf32> to vector<8x1xf32>
    %cst_1 = arith.constant 3.200000e+01 : f32
    %3 = vector.broadcast %cst_1 : f32 to vector<8x1xf32>
    %4 = arith.divf %2, %3 : vector<8x1xf32>
    %5 = vector.broadcast %4 : vector<8x1xf32> to vector<8x32xf32>
    %6 = arith.subf %0, %5 : vector<8x32xf32>
    %7 = arith.mulf %6, %6 : vector<8x32xf32>
    %cst_2 = arith.constant dense<0.000000e+00> : vector<8xf32>
    %8 = vector.multi_reduction <add>, %7, %cst_2 [1] : vector<8x32xf32> to vector<8xf32>
    %9 = vector.shape_cast %8 : vector<8xf32> to vector<8x1xf32>
    %cst_3 = arith.constant 3.200000e+01 : f32
    %10 = vector.broadcast %cst_3 : f32 to vector<8x1xf32>
    %11 = arith.divf %9, %10 : vector<8x1xf32>
    %cst_4 = arith.constant 9.99999997E-7 : f32
    %12 = vector.broadcast %cst_4 : f32 to vector<8x1xf32>
    %13 = arith.addf %11, %12 : vector<8x1xf32>
    %14 = math.rsqrt %13 : vector<8x1xf32>
    %15 = vector.broadcast %14 : vector<8x1xf32> to vector<8x32xf32>
    %16 = arith.mulf %6, %15 : vector<8x32xf32>
    %c0_5 = arith.constant 0 : index
    %c0_6 = arith.constant 0 : index
    %17 = vector.load %arg2[%c0_5, %c0_6] : memref<32x96xbf16, #tpu.memory_space<vmem>>, vector<32x96xbf16>
    %18 = arith.extf %17 : vector<32x96xbf16> to vector<32x96xf32>
    %cst_7 = arith.constant dense<0.000000e+00> : vector<8x96xf32>
    %19 = tpu.matmul %16, %18, %cst_7 {dimension_numbers = #tpu.dot_dimension_numbers<[1], [0], [0], [1], [0, 0, 1, 1], [], []>} : vector<8x32xf32>, vector<32x96xf32>, vector<8x96xf32> -> vector<8x96xf32>
    %c0_8 = arith.constant 0 : index
    %c0_9 = arith.constant 0 : index
    %20 = vector.load %arg3[%c0_8, %c0_9] : memref<1x96xf32, #tpu.memory_space<vmem>>, vector<1x96xf32>
    %21 = vector.broadcast %20 : vector<1x96xf32> to vector<8x96xf32>
    %22 = arith.addf %19, %21 : vector<8x96xf32>
    %c0_10 = arith.constant 0 : index
    %c0_11 = arith.constant 0 : index
    %23 = vector.load %arg4[%c0_10, %c0_11] : memref<8x96xf32, #tpu.memory_space<vmem>>, vector<8x96xf32>
    tpu.vector_store %arg4[%c0_10, %c0_11], %22 {strides = array<i32>} : memref<8x96xf32, #tpu.memory_space<vmem>>, vector<8x96xf32>,
    return
  }
  func.func @transform_0(%arg0: i32) -> (i32, i32) {
    %c0_i32 = arith.constant 0 : i32
    %c0_i32_0 = arith.constant 0 : i32
    return %arg0, %c0_i32 : i32, i32
  }
  func.func @transform_1(%arg0: i32) -> (i32, i32) {
    %c0_i32 = arith.constant 0 : i32
    %c0_i32_0 = arith.constant 0 : i32
    %c0_i32_1 = arith.constant 0 : i32
    return %c0_i32, %c0_i32_0 : i32, i32
  }
  func.func @transform_2(%arg0: i32) -> (i32, i32) {
    %c0_i32 = arith.constant 0 : i32
    %c0_i32_0 = arith.constant 0 : i32
    %c0_i32_1 = arith.constant 0 : i32
    return %c0_i32, %c0_i32_0 : i32, i32
  }
  func.func @transform_3(%arg0: i32) -> (i32, i32) {
    %c0_i32 = arith.constant 0 : i32
    %c0_i32_0 = arith.constant 0 : i32
    return %arg0, %c0_i32 : i32, i32
  }
}

module attributes {stable_mosaic.version = 11 : i64} {
  func.func @_output_layer_kernel(%arg0: i32, %arg1: memref<8x32xf32, #tpu.memory_space<vmem>>, %arg2: memref<32x96xbf16, #tpu.memory_space<vmem>>, %arg3: memref<1x96xf32, #tpu.memory_space<vmem>>, %arg4: memref<8x96xf32, #tpu.memory_space<vmem>>) attributes {dimension_semantics = [#tpu.dimension_semantics<parallel>], iteration_bounds = array<i64: 2>, scalar_prefetch = 0 : i64, scratch_operands = 0 : i64, tpu.core_type = #tpu.core_type<tc>, window_params = [{transform_indices = @transform_0, window_bounds = array<i64: 8, 32>}, {pipeline_mode = #tpu.pipeline_mode<synchronous>, transform_indices = @transform_1, window_bounds = array<i64: 32, 96>}, {pipeline_mode = #tpu.pipeline_mode<synchronous>, transform_indices = @transform_2, window_bounds = array<i64: 1, 96>}, {transform_indices = @transform_3, window_bounds = array<i64: 8, 96>}]} {
    %c0 = arith.constant 0 : index
    %c0_0 = arith.constant 0 : index
    %0 = vector.load %arg1[%c0, %c0_0] : memref<8x32xf32, #tpu.memory_space<vmem>>, vector<8x32xf32>
    %cst = arith.constant dense<0.000000e+00> : vector<8xf32>
    %1 = vector.multi_reduction <add>, %0, %cst [1] : vector<8x32xf32> to vector<8xf32>
    %2 = vector.shape_cast %1 : vector<8xf32> to vector<8x1xf32>
    %cst_1 = arith.constant 3.200000e+01 : f32
    %3 = vector.broadcast %cst_1 : f32 to vector<8x1xf32>
    %4 = arith.divf %2, %3 : vector<8x1xf32>
    %5 = vector.broadcast %4 : vector<8x1xf32> to vector<8x32xf32>
    %6 = arith.subf %0, %5 : vector<8x32xf32>
    %7 = arith.mulf %6, %6 : vector<8x32xf32>
    %cst_2 = arith.constant dense<0.000000e+00> : vector<8xf32>
    %8 = vector.multi_reduction <add>, %7, %cst_2 [1] : vector<8x32xf32> to vector<8xf32>
    %9 = vector.shape_cast %8 : vector<8xf32> to vector<8x1xf32>
    %cst_3 = arith.constant 3.200000e+01 : f32
    %10 = vector.broadcast %cst_3 : f32 to vector<8x1xf32>
    %11 = arith.divf %9, %10 : vector<8x1xf32>
    %cst_4 = arith.constant 9.99999997E-7 : f32
    %12 = vector.broadcast %cst_4 : f32 to vector<8x1xf32>
    %13 = arith.addf %11, %12 : vector<8x1xf32>
    %14 = math.rsqrt %13 : vector<8x1xf32>
    %15 = vector.broadcast %14 : vector<8x1xf32> to vector<8x32xf32>
    %16 = arith.mulf %6, %15 : vector<8x32xf32>
    %c0_5 = arith.constant 0 : index
    %c0_6 = arith.constant 0 : index
    %17 = vector.load %arg2[%c0_5, %c0_6] : memref<32x96xbf16, #tpu.memory_space<vmem>>, vector<32x96xbf16>
    %18 = arith.extf %17 : vector<32x96xbf16> to vector<32x96xf32>
    %cst_7 = arith.constant dense<0.000000e+00> : vector<8x96xf32>
    %19 = tpu.matmul %16, %18, %cst_7 {dimension_numbers = #tpu.dot_dimension_numbers<[1], [0], [0], [1], [0, 0, 1, 1], [], []>} : vector<8x32xf32>, vector<32x96xf32>, vector<8x96xf32> -> vector<8x96xf32>
    %c0_8 = arith.constant 0 : index
    %c0_9 = arith.constant 0 : index
    %20 = vector.load %arg3[%c0_8, %c0_9] : memref<1x96xf32, #tpu.memory_space<vmem>>, vector<1x96xf32>
    %21 = vector.broadcast %20 : vector<1x96xf32> to vector<8x96xf32>
    %22 = arith.addf %19, %21 : vector<8x96xf32>
    %c0_10 = arith.constant 0 : index
    %c0_11 = arith.constant 0 : index
    %23 = vector.load %arg4[%c0_10, %c0_11] : memref<8x96xf32, #tpu.memory_space<vmem>>, vector<8x96xf32>
    tpu.vector_store %arg4[%c0_10, %c0_11], %22 {strides = array<i32>} : memref<8x96xf32, #tpu.memory_space<vmem>>, vector<8x96xf32>,
    return
  }
  func.func @transform_0(%arg0: i32) -> (i32, i32) {
    %c0_i32 = arith.constant 0 : i32
    %c0_i32_0 = arith.constant 0 : i32
    return %arg0, %c0_i32 : i32, i32
  }
  func.func @transform_1(%arg0: i32) -> (i32, i32) {
    %c0_i32 = arith.constant 0 : i32
    %c0_i32_0 = arith.constant 0 : i32
    %c0_i32_1 = arith.constant 0 : i32
    return %c0_i32, %c0_i32_0 : i32, i32
  }
  func.func @transform_2(%arg0: i32) -> (i32, i32) {
    %c0_i32 = arith.constant 0 : i32
    %c0_i32_0 = arith.constant 0 : i32
    %c0_i32_1 = arith.constant 0 : i32
    return %c0_i32, %c0_i32_0 : i32, i32
  }
  func.func @transform_3(%arg0: i32) -> (i32, i32) {
    %c0_i32 = arith.constant 0 : i32
    %c0_i32_0 = arith.constant 0 : i32
    return %arg0, %c0_i32 : i32, i32
  }
}

</mosaic_0001>

<llo_original>
// kernel: tpu_custom_call.1
$region0: #{tpu_custom_call.1}
  #allocation0 [shape = 'u32[]', space=smem, size = 0x4, offset = 0x4, fixed_abs, tag = 'smem constant byte address 0x4 - core index']
  #allocation1 [shape = 'u32[144,128]{1,0:T(1,128)}', space=vmem, size = 0x12000, scoped, tag = 'internal scratch']
  %s0 = inlined_call_operand.hbm [shape: f32[16,32], index: 0, kind: input, shape index: {}]
  %s1 = inlined_call_operand.hbm [shape: bf16[32,96], index: 1, kind: input, shape index: {}]
  %s2 = inlined_call_operand.vmem [shape: f32[1,96], index: 2, kind: input, shape index: {}]
  %s3 = inlined_call_operand.hbm [shape: f32[16,96], index: 3, kind: output, shape index: {}]
  %s4 = sld [smem:[#allocation0]]
  $region53: #{tpu_custom_call.1} parent=0
    _
  %s6 = ssub.s32 1, %s4
  %s7 = scalar_select 0, %s6, %s4
  $region1: #{tpu_custom_call.1} parent=0
    #allocation2 [shape = 'u8[8192]{0}', space=vmem, size = 0x2000, scoped, tag = 'input window, operand 0']
    #allocation3 [shape = 's32[2]{0}', space=sflag, size = 0x8, scoped, tag = 'scoped memory for tpu_custom_call.1']
    #allocation4 [shape = 's32[2]{0}', space=sflag, size = 0x8, scoped, tag = 'scoped memory for tpu_custom_call.1']
    #allocation5 [shape = 'u8[8192]{0}', space=vmem, size = 0x2000, scoped, tag = 'input window, operand 1, single buffered']
    #allocation6 [shape = 's32[1]{0}', space=sflag, size = 0x4, scoped, tag = 'scoped memory for tpu_custom_call.1']
    #allocation7 [shape = 'u8[8192]{0}', space=vmem, size = 0x2000, scoped, tag = 'output window, operand 0']
    %8 = vsyncpa [#allocation3], 0
    %s9 = scalar_lea.sflag [#allocation3], 1
    %10 = vsyncpa %s9, 0
    %11 = vsyncpa [#allocation6], 0
    %12 = vsyncpa [#allocation4], 0
    %s13 = scalar_lea.sflag [#allocation4], 1
    %14 = vsyncpa %s13, 0
    loop: start=0, step=1, limit=4
    $region2: #{tpu_custom_call.1} parent=1 // loop_pre_header
      _
    $region3: #{tpu_custom_call.1} parent=1 // loop_header
      %s16 = sphi 0, %s20
      %p17 = scmp.ge.s32.totalorder %s16, 4
      %s26 = sphi 0, %s28
      %s29 = sphi 0, %s26
      %s30 = sphi 0, %s29
      %s46 = sphi 0, %s30
      %s50 = sphi 0, %s50
      %s52 = sphi 0, %s50
      %s53 = sphi 0, %s52
      %s67 = sphi 0, %s53
      %s71 = sphi 0, %s71
      %s73 = sphi 0, %s71
      %s74 = sphi 0, %s73
      %s88 = sphi 0, %s74
      %s94 = sphi 0, %s96
      %s97 = sphi 0, %s94
      %s98 = sphi 0, %s97
      %s114 = sphi 0, %s98
    $region4: #{tpu_custom_call.1} parent=1 // loop_header_branch
      %19 = sbr.rel (%p17) target = $region8
    $region5: #{tpu_custom_call.1} parent=1 // loop_body
      %s21 = ssub.s32 %s16, 1
      %s22 = ssub.s32 %s16, 2
      %s23 = sadd.s32 %s16, 1
      %s24 = ssub.s32 %s16, %s23
      %p25 = scmp.eq.s32.totalorder %s24, 0
      %s27 = sadd.s32 %s26, 1
      %s28 = scalar_select %p25, %s26, %s27
      %p31 = pneg %p25
      %p32 = scmp.eq.s32.totalorder %s16, 1
      %p33 = por %p31, %p32
      %p34 = scmp.ne.s32.totalorder %s26, %s29
      %p35 = scmp.eq.s32.totalorder %s16, 0
      %p36 = por %p34, %p35
      %p37 = scmp.ne.s32.totalorder %s26, %s29
      %p38 = scmp.eq.s32.totalorder %s21, 1
      %p39 = por %p37, %p38
      %p40 = scmp.ne.s32.totalorder %s29, %s30
      %p41 = scmp.eq.s32.totalorder %s21, 0
      %p42 = por %p40, %p41
      %p43 = scmp.ne.s32.totalorder %s29, %s30
      %p44 = scmp.eq.s32.totalorder %s22, 1
      %p45 = por %p43, %p44
      %p47 = scmp.ne.s32.totalorder %s30, %s46
      %p48 = scmp.eq.s32.totalorder %s22, 0
      %p49 = por %p47, %p48
      %s51 = sadd.s32 %s50, 1
      %p54 = scmp.eq.s32.totalorder %s16, 1
      %p55 = scmp.ne.s32.totalorder %s50, %s52
      %p56 = scmp.eq.s32.totalorder %s16, 0
      %p57 = por %p55, %p56
      %p58 = scmp.ne.s32.totalorder %s50, %s52
      %p59 = scmp.eq.s32.totalorder %s21, 1
      %p60 = por %p58, %p59
      %p61 = scmp.ne.s32.totalorder %s52, %s53
      %p62 = scmp.eq.s32.totalorder %s21, 0
      %p63 = por %p61, %p62
      %p64 = scmp.ne.s32.totalorder %s52, %s53
      %p65 = scmp.eq.s32.totalorder %s22, 1
      %p66 = por %p64, %p65
      %p68 = scmp.ne.s32.totalorder %s53, %s67
      %p69 = scmp.eq.s32.totalorder %s22, 0
      %p70 = por %p68, %p69
      %s72 = sadd.s32 %s71, 1
      %p75 = scmp.eq.s32.totalorder %s16, 1
      %p76 = scmp.ne.s32.totalorder %s71, %s73
      %p77 = scmp.eq.s32.totalorder %s16, 0
      %p78 = por %p76, %p77
      %p79 = scmp.ne.s32.totalorder %s71, %s73
      %p80 = scmp.eq.s32.totalorder %s21, 1
      %p81 = por %p79, %p80
      %p82 = scmp.ne.s32.totalorder %s73, %s74
      %p83 = scmp.eq.s32.totalorder %s21, 0
      %p84 = por %p82, %p83
      %p85 = scmp.ne.s32.totalorder %s73, %s74
      %p86 = scmp.eq.s32.totalorder %s22, 1
      %p87 = por %p85, %p86
      %p89 = scmp.ne.s32.totalorder %s74, %s88
      %p90 = scmp.eq.s32.totalorder %s22, 0
      %p91 = por %p89, %p90
      %s92 = ssub.s32 %s16, %s23
      %p93 = scmp.eq.s32.totalorder %s92, 0
      %s95 = sadd.s32 %s94, 1
      %s96 = scalar_select %p93, %s94, %s95
      %p99 = pneg %p93
      %p100 = scmp.eq.s32.totalorder %s16, 1
      %p101 = por %p99, %p100
      %p102 = scmp.ne.s32.totalorder %s94, %s97
      %p103 = scmp.eq.s32.totalorder %s16, 0
      %p104 = por %p102, %p103
      %p105 = scmp.ne.s32.totalorder %s94, %s97
      %p106 = scmp.eq.s32.totalorder %s21, 1
      %p107 = por %p105, %p106
      %p108 = scmp.ne.s32.totalorder %s97, %s98
      %p109 = scmp.eq.s32.totalorder %s21, 0
      %p110 = por %p108, %p109
      %p111 = scmp.ne.s32.totalorder %s97, %s98
      %p112 = scmp.eq.s32.totalorder %s22, 1
      %p113 = por %p111, %p112
      %p115 = scmp.ne.s32.totalorder %s98, %s114
      %p116 = scmp.eq.s32.totalorder %s22, 0
      %p117 = por %p115, %p116
      %p118 = scmp.le.s32.totalorder 1, %s16
      %p119 = scmp.lt.s32.totalorder %s16, 3
      %p120 = pnand %p118, %p119
      %p121 = pneg %p120
      // Predicated region
      $region9: #{tpu_custom_call.1} parent=5 // pred_check
        _
      $region10: #{tpu_custom_call.1} parent=5 // pred_check_branch
        %123 = sbr.rel (%p120) target = $region12
      $region11: #{tpu_custom_call.1} parent=5 // pred_region
        %s124 = ssub.s32 %s16, 1
        // Predicated region
        $region13: #{tpu_custom_call.1} parent=11 // pred_check
          %p125 = pneg %p63
        $region14: #{tpu_custom_call.1} parent=11 // pred_check_branch
          %127 = sbr.rel (%p125) target = $region16
        $region15: #{tpu_custom_call.1} parent=11 // pred_region
          %s129 = ssub.s32 256, 256
          %130 = vsyncadd [#allocation6], %s129
          %s131 = sshll.u32 [#allocation5], 4
          %s132 = int_to_ptr.vmem [resolvable:$true] %s131
          %137 = dma.hbm_to_vmem [thread:$0]  %s1, 256, %s132, [#allocation6], 64, 64, 4
        $region16: #{tpu_custom_call.1} parent=11 // pred_fallthru
          _
        // Predicated region
        $region17: #{tpu_custom_call.1} parent=11 // pred_check
          %p138 = pneg %p84
        $region18: #{tpu_custom_call.1} parent=11 // pred_check_branch
          %140 = sbr.rel (%p138) target = $region20
        $region19: #{tpu_custom_call.1} parent=11 // pred_region
          _
        $region20: #{tpu_custom_call.1} parent=11 // pred_fallthru
          _
      $region12: #{tpu_custom_call.1} parent=5 // pred_fallthru
        _
      %p141 = scmp.lt.s32.totalorder %s16, 2
      // Predicated region
      $region21: #{tpu_custom_call.1} parent=5 // pred_check
        %p142 = pneg %p141
      $region22: #{tpu_custom_call.1} parent=5 // pred_check_branch
        %144 = sbr.rel (%p142) target = $region24
      $region23: #{tpu_custom_call.1} parent=5 // pred_region
        // Predicated region
        $region25: #{tpu_custom_call.1} parent=23 // pred_check
          %p145 = pneg %p36
        $region26: #{tpu_custom_call.1} parent=23 // pred_check_branch
          %147 = sbr.rel (%p145) target = $region28
        $region27: #{tpu_custom_call.1} parent=23 // pred_region
          %s148 = sand.u32 %s26, 1
          %s149 = scalar_lea.sflag [#allocation3], %s148
          %s150 = sand.u32 %s26, 1
          %s151 = smul.addr %s150, 8
          %s152 = scalar_lea.vmem [#allocation2], %s151
          %s154 = ssub.s32 128, 128
          %155 = vsyncadd %s149, %s154
          %s156 = smul.addr %s16, 128
          %s157 = scalar_lea.hbm %s0, %s156
          %s159 = sshll.u32 %s152, 4
          %s160 = int_to_ptr.vmem [resolvable:$true] %s159
          %162 = dma.hbm_to_vmem [thread:$0]  %s157, 128, %s160, %s149
        $region28: #{tpu_custom_call.1} parent=23 // pred_fallthru
          _
      $region24: #{tpu_custom_call.1} parent=5 // pred_fallthru
        _
      %p163 = scmp.le.s32.totalorder 1, %s16
      %p164 = scmp.lt.s32.totalorder %s16, 3
      %p165 = pnand %p163, %p164
      %p166 = pneg %p165
      // Predicated region
      $region29: #{tpu_custom_call.1} parent=5 // pred_check
        _
      $region30: #{tpu_custom_call.1} parent=5 // pred_check_branch
        %168 = sbr.rel (%p165) target = $region32
      $region31: #{tpu_custom_call.1} parent=5 // pred_region
        %s169 = ssub.s32 %s16, 1
        %s170 = sand.u32 %s29, 1
        %s171 = scalar_lea.sflag [#allocation3], %s170
        %s172 = sand.u32 %s29, 1
        %s173 = smul.addr %s172, 8
        %s174 = scalar_lea.vmem [#allocation2], %s173
        // Predicated region
        $region33: #{tpu_custom_call.1} parent=31 // pred_check
          %p175 = pneg %p42
        $region34: #{tpu_custom_call.1} parent=31 // pred_check_branch
          %177 = sbr.rel (%p175) target = $region36
        $region35: #{tpu_custom_call.1} parent=31 // pred_region
          %178 = dma.done %s171, 128
        $region36: #{tpu_custom_call.1} parent=31 // pred_fallthru
          _
        // Predicated region
        $region37: #{tpu_custom_call.1} parent=31 // pred_check
          %p179 = pneg %p63
        $region38: #{tpu_custom_call.1} parent=31 // pred_check_branch
          %181 = sbr.rel (%p179) target = $region40
        $region39: #{tpu_custom_call.1} parent=31 // pred_region
          %182 = dma.done [#allocation6], 256
        $region40: #{tpu_custom_call.1} parent=31 // pred_fallthru
          _
        %s183 = sand.u32 %s29, 1
        %s184 = scalar_lea.sflag [#allocation3], %s183
        %s185 = sand.u32 %s29, 1
        %s186 = smul.addr %s185, 8
        %s187 = scalar_lea.vmem [#allocation2], %s186
        %p188 = pneg %p42
        %p189 = pneg %p39
        %p190 = pneg %p63
        %p191 = pneg %p60
        %p192 = pneg %p84
        %p193 = pneg %p81
        %p194 = pneg %p110
        %p195 = pneg %p107
        %s196 = sand.u32 %s97, 1
        %s197 = scalar_lea.sflag [#allocation4], %s196
        %s198 = sand.u32 %s97, 1
        %s199 = smul.addr %s198, 8
        %s200 = scalar_lea.vmem [#allocation7], %s199
        %v201 = vld [vmem:[%s174] sm:$0xff]
        %vm202 = vcmask 261120
        %v203 = vsel %vm202, %v201, 0.0
        %204 = vadd.xlane.f32.xlu0 %v203
        %v205 = vpop.xlane.xlu0 %204
        %v206 = vrcp.pop 32.0
        %v207 = vmul.f32 %v205, %v206
        %v208 = vsub.f32 %v201, %v207
        %v209 = vmul.f32 %v208, %v208
        %v210 = vsel %vm202, %v209, 0.0
        %211 = vadd.xlane.f32.xlu0 %v210
        %v212 = vpop.xlane.xlu0 %211
        %v213 = vmul.f32 %v212, %v206
        %v214 = vadd.f32 %v213, 1e-06
        %v215 = vrsqrt.pop %v214
        %v216 = vmul.f32 %v208, %v215
        %v217 = vld [vmem:[#allocation5] sm:$0xf]
        %v218 = vld [vmem:[#allocation5 + $0x4] sm:$0xf]
        %v219 = vld [vmem:[#allocation5 + $0x8] sm:$0xf]
        %v220 = vld [vmem:[#allocation5 + $0xc] sm:$0xf]
        %v221 = vunpack.c.l.bf16 %v217
        %v222 = vunpack.c.l.bf16 %v218
        %v223 = vunpack.c.l.bf16 %v219
        %v224 = vunpack.c.l.bf16 %v220
        %v225 = vld [vmem:[%s2] sm:$0x1]
        %v227 = vlaneseq
        %v228 = vshrl.u32 %v227, 7
        %v229 = vsub.s32 0, %v228
        %v230 = vrot.slane %v225, %v229
        %v233 = vsel %vm202, %v216, 0
        %235 = vmatprep.subr.mxu0 0.0
        %236 = vmatpush1.msra.mxu0 0.0
        %237 = vmatprep.subr.mxu0 0.0
        %238 = vmatpush1.msra.mxu0 0.0
        %239 = vmatprep.subr.mxu0 0.0
        %240 = vmatpush1.msra.mxu0 0.0
        %241 = vmatprep.subr.mxu0 0.0
        %242 = vmatpush1.msra.mxu0 0.0
        %243 = vmatprep.subr.mxu0 0.0
        %244 = vmatpush1.msra.mxu0 0.0
        %245 = vmatprep.subr.mxu0 0.0
        %246 = vmatpush1.msra.mxu0 0.0
        %247 = vmatprep.subr.mxu0 0.0
        %248 = vmatpush1.msra.mxu0 0.0
        %249 = vmatprep.subr.mxu0 0.0
        %250 = vmatpush1.msra.mxu0 0.0
        %251 = vmatprep.subr.mxu0 0.0
        %252 = vmatpush1.msra.mxu0 0.0
        %253 = vmatprep.subr.mxu0 0.0
        %254 = vmatpush1.msra.mxu0 0.0
        %255 = vmatprep.subr.mxu0 0.0
        %256 = vmatpush1.msra.mxu0 0.0
        %257 = vmatprep.subr.mxu0 0.0
        %258 = vmatpush1.msra.mxu0 0.0
        %259 = vmatprep.subr.mxu0 0.0
        %260 = vmatpush1.msra.mxu0 %v224
        %261 = vmatprep.subr.mxu0 0.0
        %262 = vmatpush1.msra.mxu0 %v223
        %263 = vmatprep.subr.mxu0 0.0
        %264 = vmatpush1.msra.mxu0 %v222
        %265 = vmatprep.subr.mxu0 0.0
        %266 = vmatpush1.msra.mxu0 %v221
        %267 = vmatprep.subr.mxu0 0.0
        %268 = vmatpush2.msra.mxu0 0.0
        %269 = vmatprep.subr.mxu0 0.0
        %270 = vmatpush2.msra.mxu0 0.0
        %271 = vmatprep.subr.mxu0 0.0
        %272 = vmatpush2.msra.mxu0 0.0
        %273 = vmatprep.subr.mxu0 0.0
        %274 = vmatpush2.msra.mxu0 0.0
        %275 = vmatprep.subr.mxu0 0.0
        %276 = vmatpush2.msra.mxu0 0.0
        %277 = vmatprep.subr.mxu0 0.0
        %278 = vmatpush2.msra.mxu0 0.0
        %279 = vmatprep.subr.mxu0 0.0
        %280 = vmatpush2.msra.mxu0 0.0
        %281 = vmatprep.subr.mxu0 0.0
        %282 = vmatpush2.msra.mxu0 0.0
        %283 = vmatprep.subr.mxu0 0.0
        %284 = vmatpush2.msra.mxu0 0.0
        %285 = vmatprep.subr.mxu0 0.0
        %286 = vmatpush2.msra.mxu0 0.0
        %287 = vmatprep.subr.mxu0 0.0
        %288 = vmatpush2.msra.mxu0 0.0
        %289 = vmatprep.subr.mxu0 0.0
        %290 = vmatpush2.msra.mxu0 0.0
        %291 = vmatprep.subr.mxu0 0.0
        %292 = vmatpush2.msra.mxu0 0.0
        %293 = vmatprep.subr.mxu0 0.0
        %294 = vmatpush2.msra.mxu0 0.0
        %295 = vmatprep.subr.mxu0 0.0
        %296 = vmatpush2.msra.mxu0 0.0
        %297 = vmatprep.subr.mxu0 0.0
        %298 = vmatpush2.msra.mxu0 0.0
        %299 = vmatprep.mubr.f32.mxu0 0.0
        %300 = vmatmul.mubr.f32.gmra.mxu0 %v233
        %v301 = vpop.f32.mrf.mxu0
        %v302 = vadd.f32 %v230, %v301
        %v303 = vpop.f32.mrf.mxu0
        %304 = vdwg.mxu0
        %vm305 = vcmask 785408
        %306 = vst.msk [vmem:[%s200] sm:$0xff] %vm305, %v302
        %s307 = sand.u32 %s97, 1
        %s308 = scalar_lea.sflag [#allocation4], %s307
        %s309 = sand.u32 %s97, 1
        %s310 = smul.addr %s309, 8
        %s311 = scalar_lea.vmem [#allocation7], %s310
        // Predicated region
        $region41: #{tpu_custom_call.1} parent=31 // pred_check
          %p312 = pneg %p107
        $region42: #{tpu_custom_call.1} parent=31 // pred_check_branch
          %314 = sbr.rel (%p312) target = $region44
        $region43: #{tpu_custom_call.1} parent=31 // pred_region
          %s316 = ssub.s32 128, 128
          %317 = vsyncadd %s308, %s316
          %s318 = smul.addr %s21, 128
          %s319 = scalar_lea.hbm %s3, %s318
          %s321 = sshll.u32 %s311, 4
          %s322 = int_to_ptr.vmem [resolvable:$true] %s321
          %324 = dma.vmem_to_hbm [thread:$0]  %s322, 128, %s319, %s308
        $region44: #{tpu_custom_call.1} parent=31 // pred_fallthru
          _
      $region32: #{tpu_custom_call.1} parent=5 // pred_fallthru
        _
      %p325 = scmp.le.s32.totalorder 2, %s16
      // Predicated region
      $region45: #{tpu_custom_call.1} parent=5 // pred_check
        %p326 = pneg %p325
      $region46: #{tpu_custom_call.1} parent=5 // pred_check_branch
        %328 = sbr.rel (%p326) target = $region48
      $region47: #{tpu_custom_call.1} parent=5 // pred_region
        %s329 = ssub.s32 %s16, 2
        // Predicated region
        $region49: #{tpu_custom_call.1} parent=47 // pred_check
          %p330 = pneg %p113
        $region50: #{tpu_custom_call.1} parent=47 // pred_check_branch
          %332 = sbr.rel (%p330) target = $region52
        $region51: #{tpu_custom_call.1} parent=47 // pred_region
          %s333 = sand.u32 %s98, 1
          %s334 = scalar_lea.sflag [#allocation4], %s333
          %s335 = sand.u32 %s98, 1
          %s336 = smul.addr %s335, 8
          %s337 = scalar_lea.vmem [#allocation7], %s336
          %338 = dma.done %s334, 128
        $region52: #{tpu_custom_call.1} parent=47 // pred_fallthru
          _
      $region48: #{tpu_custom_call.1} parent=5 // pred_fallthru
        _
    $region6: #{tpu_custom_call.1} parent=1 // loop_footer
      %s20 = sadd.s32 1, %s16
    $region7: #{tpu_custom_call.1} parent=1 // loop_footer_branch
      %15 = sbr.rel target = $region3
    $region8: #{tpu_custom_call.1} parent=1 // loop_exit
      _
    %339 = vsyncpa [#allocation3], 1
    %s340 = scalar_lea.sflag [#allocation3], 1
    %341 = vsyncpa %s340, 1
    %342 = vsyncpa [#allocation6], 1
    %343 = vsyncpa [#allocation4], 1
    %s344 = scalar_lea.sflag [#allocation4], 1
    %345 = vsyncpa %s344, 1

// kernel: tpu_custom_call.1
$region0: #{tpu_custom_call.1}
  #allocation0 [shape = 'u32[]', space=smem, size = 0x4, offset = 0x4, fixed_abs, tag = 'smem constant byte address 0x4 - core index']
  #allocation1 [shape = 'u32[144,128]{1,0:T(1,128)}', space=vmem, size = 0x12000, scoped, tag = 'internal scratch']
  %s0 = inlined_call_operand.hbm [shape: f32[16,32], index: 0, kind: input, shape index: {}]
  %s1 = inlined_call_operand.hbm [shape: bf16[32,96], index: 1, kind: input, shape index: {}]
  %s2 = inlined_call_operand.vmem [shape: f32[1,96], index: 2, kind: input, shape index: {}]
  %s3 = inlined_call_operand.hbm [shape: f32[16,96], index: 3, kind: output, shape index: {}]
  %s4 = sld [smem:[#allocation0]]
  $region53: #{tpu_custom_call.1} parent=0
    _
  %s6 = ssub.s32 1, %s4
  %s7 = scalar_select 0, %s6, %s4
  $region1: #{tpu_custom_call.1} parent=0
    #allocation2 [shape = 'u8[8192]{0}', space=vmem, size = 0x2000, scoped, tag = 'input window, operand 0']
    #allocation3 [shape = 's32[2]{0}', space=sflag, size = 0x8, scoped, tag = 'scoped memory for tpu_custom_call.1']
    #allocation4 [shape = 's32[2]{0}', space=sflag, size = 0x8, scoped, tag = 'scoped memory for tpu_custom_call.1']
    #allocation5 [shape = 'u8[8192]{0}', space=vmem, size = 0x2000, scoped, tag = 'input window, operand 1, single buffered']
    #allocation6 [shape = 's32[1]{0}', space=sflag, size = 0x4, scoped, tag = 'scoped memory for tpu_custom_call.1']
    #allocation7 [shape = 'u8[8192]{0}', space=vmem, size = 0x2000, scoped, tag = 'output window, operand 0']
    %8 = vsyncpa [#allocation3], 0
    %s9 = scalar_lea.sflag [#allocation3], 1
    %10 = vsyncpa %s9, 0
    %11 = vsyncpa [#allocation6], 0
    %12 = vsyncpa [#allocation4], 0
    %s13 = scalar_lea.sflag [#allocation4], 1
    %14 = vsyncpa %s13, 0
    loop: start=0, step=1, limit=4
    $region2: #{tpu_custom_call.1} parent=1 // loop_pre_header
      _
    $region3: #{tpu_custom_call.1} parent=1 // loop_header
      %s16 = sphi 0, %s20
      %p17 = scmp.ge.s32.totalorder %s16, 4
      %s26 = sphi 0, %s28
      %s29 = sphi 0, %s26
      %s30 = sphi 0, %s29
      %s46 = sphi 0, %s30
      %s50 = sphi 0, %s50
      %s52 = sphi 0, %s50
      %s53 = sphi 0, %s52
      %s67 = sphi 0, %s53
      %s71 = sphi 0, %s71
      %s73 = sphi 0, %s71
      %s74 = sphi 0, %s73
      %s88 = sphi 0, %s74
      %s94 = sphi 0, %s96
      %s97 = sphi 0, %s94
      %s98 = sphi 0, %s97
      %s114 = sphi 0, %s98
    $region4: #{tpu_custom_call.1} parent=1 // loop_header_branch
      %19 = sbr.rel (%p17) target = $region8
    $region5: #{tpu_custom_call.1} parent=1 // loop_body
      %s21 = ssub.s32 %s16, 1
      %s22 = ssub.s32 %s16, 2
      %s23 = sadd.s32 %s16, 1
      %s24 = ssub.s32 %s16, %s23
      %p25 = scmp.eq.s32.totalorder %s24, 0
      %s27 = sadd.s32 %s26, 1
      %s28 = scalar_select %p25, %s26, %s27
      %p31 = pneg %p25
      %p32 = scmp.eq.s32.totalorder %s16, 1
      %p33 = por %p31, %p32
      %p34 = scmp.ne.s32.totalorder %s26, %s29
      %p35 = scmp.eq.s32.totalorder %s16, 0
      %p36 = por %p34, %p35
      %p37 = scmp.ne.s32.totalorder %s26, %s29
      %p38 = scmp.eq.s32.totalorder %s21, 1
      %p39 = por %p37, %p38
      %p40 = scmp.ne.s32.totalorder %s29, %s30
      %p41 = scmp.eq.s32.totalorder %s21, 0
      %p42 = por %p40, %p41
      %p43 = scmp.ne.s32.totalorder %s29, %s30
      %p44 = scmp.eq.s32.totalorder %s22, 1
      %p45 = por %p43, %p44
      %p47 = scmp.ne.s32.totalorder %s30, %s46
      %p48 = scmp.eq.s32.totalorder %s22, 0
      %p49 = por %p47, %p48
      %s51 = sadd.s32 %s50, 1
      %p54 = scmp.eq.s32.totalorder %s16, 1
      %p55 = scmp.ne.s32.totalorder %s50, %s52
      %p56 = scmp.eq.s32.totalorder %s16, 0
      %p57 = por %p55, %p56
      %p58 = scmp.ne.s32.totalorder %s50, %s52
      %p59 = scmp.eq.s32.totalorder %s21, 1
      %p60 = por %p58, %p59
      %p61 = scmp.ne.s32.totalorder %s52, %s53
      %p62 = scmp.eq.s32.totalorder %s21, 0
      %p63 = por %p61, %p62
      %p64 = scmp.ne.s32.totalorder %s52, %s53
      %p65 = scmp.eq.s32.totalorder %s22, 1
      %p66 = por %p64, %p65
      %p68 = scmp.ne.s32.totalorder %s53, %s67
      %p69 = scmp.eq.s32.totalorder %s22, 0
      %p70 = por %p68, %p69
      %s72 = sadd.s32 %s71, 1
      %p75 = scmp.eq.s32.totalorder %s16, 1
      %p76 = scmp.ne.s32.totalorder %s71, %s73
      %p77 = scmp.eq.s32.totalorder %s16, 0
      %p78 = por %p76, %p77
      %p79 = scmp.ne.s32.totalorder %s71, %s73
      %p80 = scmp.eq.s32.totalorder %s21, 1
      %p81 = por %p79, %p80
      %p82 = scmp.ne.s32.totalorder %s73, %s74
      %p83 = scmp.eq.s32.totalorder %s21, 0
      %p84 = por %p82, %p83
      %p85 = scmp.ne.s32.totalorder %s73, %s74
      %p86 = scmp.eq.s32.totalorder %s22, 1
      %p87 = por %p85, %p86
      %p89 = scmp.ne.s32.totalorder %s74, %s88
      %p90 = scmp.eq.s32.totalorder %s22, 0
      %p91 = por %p89, %p90
      %s92 = ssub.s32 %s16, %s23
      %p93 = scmp.eq.s32.totalorder %s92, 0
      %s95 = sadd.s32 %s94, 1
      %s96 = scalar_select %p93, %s94, %s95
      %p99 = pneg %p93
      %p100 = scmp.eq.s32.totalorder %s16, 1
      %p101 = por %p99, %p100
      %p102 = scmp.ne.s32.totalorder %s94, %s97
      %p103 = scmp.eq.s32.totalorder %s16, 0
      %p104 = por %p102, %p103
      %p105 = scmp.ne.s32.totalorder %s94, %s97
      %p106 = scmp.eq.s32.totalorder %s21, 1
      %p107 = por %p105, %p106
      %p108 = scmp.ne.s32.totalorder %s97, %s98
      %p109 = scmp.eq.s32.totalorder %s21, 0
      %p110 = por %p108, %p109
      %p111 = scmp.ne.s32.totalorder %s97, %s98
      %p112 = scmp.eq.s32.totalorder %s22, 1
      %p113 = por %p111, %p112
      %p115 = scmp.ne.s32.totalorder %s98, %s114
      %p116 = scmp.eq.s32.totalorder %s22, 0
      %p117 = por %p115, %p116
      %p118 = scmp.le.s32.totalorder 1, %s16
      %p119 = scmp.lt.s32.totalorder %s16, 3
      %p120 = pnand %p118, %p119
      %p121 = pneg %p120
      // Predicated region
      $region9: #{tpu_custom_call.1} parent=5 // pred_check
        _
      $region10: #{tpu_custom_call.1} parent=5 // pred_check_branch
        %123 = sbr.rel (%p120) target = $region12
      $region11: #{tpu_custom_call.1} parent=5 // pred_region
        %s124 = ssub.s32 %s16, 1
        // Predicated region
        $region13: #{tpu_custom_call.1} parent=11 // pred_check
          %p125 = pneg %p63
        $region14: #{tpu_custom_call.1} parent=11 // pred_check_branch
          %127 = sbr.rel (%p125) target = $region16
        $region15: #{tpu_custom_call.1} parent=11 // pred_region
          %s129 = ssub.s32 256, 256
          %130 = vsyncadd [#allocation6], %s129
          %s131 = sshll.u32 [#allocation5], 4
          %s132 = int_to_ptr.vmem [resolvable:$true] %s131
          %137 = dma.hbm_to_vmem [thread:$0]  %s1, 256, %s132, [#allocation6], 64, 64, 4
        $region16: #{tpu_custom_call.1} parent=11 // pred_fallthru
          _
        // Predicated region
        $region17: #{tpu_custom_call.1} parent=11 // pred_check
          %p138 = pneg %p84
        $region18: #{tpu_custom_call.1} parent=11 // pred_check_branch
          %140 = sbr.rel (%p138) target = $region20
        $region19: #{tpu_custom_call.1} parent=11 // pred_region
          _
        $region20: #{tpu_custom_call.1} parent=11 // pred_fallthru
          _
      $region12: #{tpu_custom_call.1} parent=5 // pred_fallthru
        _
      %p141 = scmp.lt.s32.totalorder %s16, 2
      // Predicated region
      $region21: #{tpu_custom_call.1} parent=5 // pred_check
        %p142 = pneg %p141
      $region22: #{tpu_custom_call.1} parent=5 // pred_check_branch
        %144 = sbr.rel (%p142) target = $region24
      $region23: #{tpu_custom_call.1} parent=5 // pred_region
        // Predicated region
        $region25: #{tpu_custom_call.1} parent=23 // pred_check
          %p145 = pneg %p36
        $region26: #{tpu_custom_call.1} parent=23 // pred_check_branch
          %147 = sbr.rel (%p145) target = $region28
        $region27: #{tpu_custom_call.1} parent=23 // pred_region
          %s148 = sand.u32 %s26, 1
          %s149 = scalar_lea.sflag [#allocation3], %s148
          %s150 = sand.u32 %s26, 1
          %s151 = smul.addr %s150, 8
          %s152 = scalar_lea.vmem [#allocation2], %s151
          %s154 = ssub.s32 128, 128
          %155 = vsyncadd %s149, %s154
          %s156 = smul.addr %s16, 128
          %s157 = scalar_lea.hbm %s0, %s156
          %s159 = sshll.u32 %s152, 4
          %s160 = int_to_ptr.vmem [resolvable:$true] %s159
          %162 = dma.hbm_to_vmem [thread:$0]  %s157, 128, %s160, %s149
        $region28: #{tpu_custom_call.1} parent=23 // pred_fallthru
          _
      $region24: #{tpu_custom_call.1} parent=5 // pred_fallthru
        _
      %p163 = scmp.le.s32.totalorder 1, %s16
      %p164 = scmp.lt.s32.totalorder %s16, 3
      %p165 = pnand %p163, %p164
      %p166 = pneg %p165
      // Predicated region
      $region29: #{tpu_custom_call.1} parent=5 // pred_check
        _
      $region30: #{tpu_custom_call.1} parent=5 // pred_check_branch
        %168 = sbr.rel (%p165) target = $region32
      $region31: #{tpu_custom_call.1} parent=5 // pred_region
        %s169 = ssub.s32 %s16, 1
        %s170 = sand.u32 %s29, 1
        %s171 = scalar_lea.sflag [#allocation3], %s170
        %s172 = sand.u32 %s29, 1
        %s173 = smul.addr %s172, 8
        %s174 = scalar_lea.vmem [#allocation2], %s173
        // Predicated region
        $region33: #{tpu_custom_call.1} parent=31 // pred_check
          %p175 = pneg %p42
        $region34: #{tpu_custom_call.1} parent=31 // pred_check_branch
          %177 = sbr.rel (%p175) target = $region36
        $region35: #{tpu_custom_call.1} parent=31 // pred_region
          %178 = dma.done %s171, 128
        $region36: #{tpu_custom_call.1} parent=31 // pred_fallthru
          _
        // Predicated region
        $region37: #{tpu_custom_call.1} parent=31 // pred_check
          %p179 = pneg %p63
        $region38: #{tpu_custom_call.1} parent=31 // pred_check_branch
          %181 = sbr.rel (%p179) target = $region40
        $region39: #{tpu_custom_call.1} parent=31 // pred_region
          %182 = dma.done [#allocation6], 256
        $region40: #{tpu_custom_call.1} parent=31 // pred_fallthru
          _
        %s183 = sand.u32 %s29, 1
        %s184 = scalar_lea.sflag [#allocation3], %s183
        %s185 = sand.u32 %s29, 1
        %s186 = smul.addr %s185, 8
        %s187 = scalar_lea.vmem [#allocation2], %s186
        %p188 = pneg %p42
        %p189 = pneg %p39
        %p190 = pneg %p63
        %p191 = pneg %p60
        %p192 = pneg %p84
        %p193 = pneg %p81
        %p194 = pneg %p110
        %p195 = pneg %p107
        %s196 = sand.u32 %s97, 1
        %s197 = scalar_lea.sflag [#allocation4], %s196
        %s198 = sand.u32 %s97, 1
        %s199 = smul.addr %s198, 8
        %s200 = scalar_lea.vmem [#allocation7], %s199
        %v201 = vld [vmem:[%s174] sm:$0xff]
        %vm202 = vcmask 261120
        %v203 = vsel %vm202, %v201, 0.0
        %204 = vadd.xlane.f32.xlu0 %v203
        %v205 = vpop.xlane.xlu0 %204
        %v206 = vrcp.pop 32.0
        %v207 = vmul.f32 %v205, %v206
        %v208 = vsub.f32 %v201, %v207
        %v209 = vmul.f32 %v208, %v208
        %v210 = vsel %vm202, %v209, 0.0
        %211 = vadd.xlane.f32.xlu0 %v210
        %v212 = vpop.xlane.xlu0 %211
        %v213 = vmul.f32 %v212, %v206
        %v214 = vadd.f32 %v213, 1e-06
        %v215 = vrsqrt.pop %v214
        %v216 = vmul.f32 %v208, %v215
        %v217 = vld [vmem:[#allocation5] sm:$0xf]
        %v218 = vld [vmem:[#allocation5 + $0x4] sm:$0xf]
        %v219 = vld [vmem:[#allocation5 + $0x8] sm:$0xf]
        %v220 = vld [vmem:[#allocation5 + $0xc] sm:$0xf]
        %v221 = vunpack.c.l.bf16 %v217
        %v222 = vunpack.c.l.bf16 %v218
        %v223 = vunpack.c.l.bf16 %v219
        %v224 = vunpack.c.l.bf16 %v220
        %v225 = vld [vmem:[%s2] sm:$0x1]
        %v227 = vlaneseq
        %v228 = vshrl.u32 %v227, 7
        %v229 = vsub.s32 0, %v228
        %v230 = vrot.slane %v225, %v229
        %v233 = vsel %vm202, %v216, 0
        %235 = vmatprep.subr.mxu0 0.0
        %236 = vmatpush1.msra.mxu0 0.0
        %237 = vmatprep.subr.mxu0 0.0
        %238 = vmatpush1.msra.mxu0 0.0
        %239 = vmatprep.subr.mxu0 0.0
        %240 = vmatpush1.msra.mxu0 0.0
        %241 = vmatprep.subr.mxu0 0.0
        %242 = vmatpush1.msra.mxu0 0.0
        %243 = vmatprep.subr.mxu0 0.0
        %244 = vmatpush1.msra.mxu0 0.0
        %245 = vmatprep.subr.mxu0 0.0
        %246 = vmatpush1.msra.mxu0 0.0
        %247 = vmatprep.subr.mxu0 0.0
        %248 = vmatpush1.msra.mxu0 0.0
        %249 = vmatprep.subr.mxu0 0.0
        %250 = vmatpush1.msra.mxu0 0.0
        %251 = vmatprep.subr.mxu0 0.0
        %252 = vmatpush1.msra.mxu0 0.0
        %253 = vmatprep.subr.mxu0 0.0
        %254 = vmatpush1.msra.mxu0 0.0
        %255 = vmatprep.subr.mxu0 0.0
        %256 = vmatpush1.msra.mxu0 0.0
        %257 = vmatprep.subr.mxu0 0.0
        %258 = vmatpush1.msra.mxu0 0.0
        %259 = vmatprep.subr.mxu0 0.0
        %260 = vmatpush1.msra.mxu0 %v224
        %261 = vmatprep.subr.mxu0 0.0
        %262 = vmatpush1.msra.mxu0 %v223
        %263 = vmatprep.subr.mxu0 0.0
        %264 = vmatpush1.msra.mxu0 %v222
        %265 = vmatprep.subr.mxu0 0.0
        %266 = vmatpush1.msra.mxu0 %v221
        %267 = vmatprep.subr.mxu0 0.0
        %268 = vmatpush2.msra.mxu0 0.0
        %269 = vmatprep.subr.mxu0 0.0
        %270 = vmatpush2.msra.mxu0 0.0
        %271 = vmatprep.subr.mxu0 0.0
        %272 = vmatpush2.msra.mxu0 0.0
        %273 = vmatprep.subr.mxu0 0.0
        %274 = vmatpush2.msra.mxu0 0.0
        %275 = vmatprep.subr.mxu0 0.0
        %276 = vmatpush2.msra.mxu0 0.0
        %277 = vmatprep.subr.mxu0 0.0
        %278 = vmatpush2.msra.mxu0 0.0
        %279 = vmatprep.subr.mxu0 0.0
        %280 = vmatpush2.msra.mxu0 0.0
        %281 = vmatprep.subr.mxu0 0.0
        %282 = vmatpush2.msra.mxu0 0.0
        %283 = vmatprep.subr.mxu0 0.0
        %284 = vmatpush2.msra.mxu0 0.0
        %285 = vmatprep.subr.mxu0 0.0
        %286 = vmatpush2.msra.mxu0 0.0
        %287 = vmatprep.subr.mxu0 0.0
        %288 = vmatpush2.msra.mxu0 0.0
        %289 = vmatprep.subr.mxu0 0.0
        %290 = vmatpush2.msra.mxu0 0.0
        %291 = vmatprep.subr.mxu0 0.0
        %292 = vmatpush2.msra.mxu0 0.0
        %293 = vmatprep.subr.mxu0 0.0
        %294 = vmatpush2.msra.mxu0 0.0
        %295 = vmatprep.subr.mxu0 0.0
        %296 = vmatpush2.msra.mxu0 0.0
        %297 = vmatprep.subr.mxu0 0.0
        %298 = vmatpush2.msra.mxu0 0.0
        %299 = vmatprep.mubr.f32.mxu0 0.0
        %300 = vmatmul.mubr.f32.gmra.mxu0 %v233
        %v301 = vpop.f32.mrf.mxu0
        %v302 = vadd.f32 %v230, %v301
        %v303 = vpop.f32.mrf.mxu0
        %304 = vdwg.mxu0
        %vm305 = vcmask 785408
        %306 = vst.msk [vmem:[%s200] sm:$0xff] %vm305, %v302
        %s307 = sand.u32 %s97, 1
        %s308 = scalar_lea.sflag [#allocation4], %s307
        %s309 = sand.u32 %s97, 1
        %s310 = smul.addr %s309, 8
        %s311 = scalar_lea.vmem [#allocation7], %s310
        // Predicated region
        $region41: #{tpu_custom_call.1} parent=31 // pred_check
          %p312 = pneg %p107
        $region42: #{tpu_custom_call.1} parent=31 // pred_check_branch
          %314 = sbr.rel (%p312) target = $region44
        $region43: #{tpu_custom_call.1} parent=31 // pred_region
          %s316 = ssub.s32 128, 128
          %317 = vsyncadd %s308, %s316
          %s318 = smul.addr %s21, 128
          %s319 = scalar_lea.hbm %s3, %s318
          %s321 = sshll.u32 %s311, 4
          %s322 = int_to_ptr.vmem [resolvable:$true] %s321
          %324 = dma.vmem_to_hbm [thread:$0]  %s322, 128, %s319, %s308
        $region44: #{tpu_custom_call.1} parent=31 // pred_fallthru
          _
      $region32: #{tpu_custom_call.1} parent=5 // pred_fallthru
        _
      %p325 = scmp.le.s32.totalorder 2, %s16
      // Predicated region
      $region45: #{tpu_custom_call.1} parent=5 // pred_check
        %p326 = pneg %p325
      $region46: #{tpu_custom_call.1} parent=5 // pred_check_branch
        %328 = sbr.rel (%p326) target = $region48
      $region47: #{tpu_custom_call.1} parent=5 // pred_region
        %s329 = ssub.s32 %s16, 2
        // Predicated region
        $region49: #{tpu_custom_call.1} parent=47 // pred_check
          %p330 = pneg %p113
        $region50: #{tpu_custom_call.1} parent=47 // pred_check_branch
          %332 = sbr.rel (%p330) target = $region52
        $region51: #{tpu_custom_call.1} parent=47 // pred_region
          %s333 = sand.u32 %s98, 1
          %s334 = scalar_lea.sflag [#allocation4], %s333
          %s335 = sand.u32 %s98, 1
          %s336 = smul.addr %s335, 8
          %s337 = scalar_lea.vmem [#allocation7], %s336
          %338 = dma.done %s334, 128
        $region52: #{tpu_custom_call.1} parent=47 // pred_fallthru
          _
      $region48: #{tpu_custom_call.1} parent=5 // pred_fallthru
        _
    $region6: #{tpu_custom_call.1} parent=1 // loop_footer
      %s20 = sadd.s32 1, %s16
    $region7: #{tpu_custom_call.1} parent=1 // loop_footer_branch
      %15 = sbr.rel target = $region3
    $region8: #{tpu_custom_call.1} parent=1 // loop_exit
      _
    %339 = vsyncpa [#allocation3], 1
    %s340 = scalar_lea.sflag [#allocation3], 1
    %341 = vsyncpa %s340, 1
    %342 = vsyncpa [#allocation6], 1
    %343 = vsyncpa [#allocation4], 1
    %s344 = scalar_lea.sflag [#allocation4], 1
    %345 = vsyncpa %s344, 1

</llo_original>
